<compile_context>
chip_gen: v5e
topology: v5e:2x2
jax: 0.10.0
libtpu: 0.0.40
codegen_flags: <defaults>
</compile_context>

<pallas_src>
import jax
import jax.numpy as jnp
from jax.experimental import pallas as pl
from jax.experimental.pallas import tpu as pltpu

_LANE = 128
_TARGET_BLOCK_BYTES = 4 * 1024 * 1024   # ~4 MiB per block per array
_MIN_GRID_STEPS = 8                     # keep >=8 grid steps for v7x's 2 TCs


def _helu_kernel(x_ref, o_ref):
    # Upcast to f32 so the VPU/EUP path is valid on v5e too.
    x = x_ref[...].astype(jnp.float32)
    # Single EUP exp, reused by both branches.
    e = jnp.exp(-x)
    # sigmoid(x) = 1 / (1 + exp(-x)) via approx EUP reciprocal (free slot).
    sig = pl.reciprocal(1.0 + e, approx=True)
    silu = x * sig
    # x > 0 guarantees exp(-x) < 1, so the abs in the spec is redundant.
    out = jnp.where(x <= 0.0, silu, 0.5 * x + (1.0 - e))
    o_ref[...] = out.astype(o_ref.dtype)


def _sublane_factor(dtype) -> int:
    # Sub-32-bit dtypes pack along sublanes: 8 for f32, 16 for bf16, 32 for i8.
    itemsize = jnp.dtype(dtype).itemsize
    return max(8, 32 // itemsize)


def helu(x: jax.Array) -> jax.Array:
    """Elementwise HELU activation via a Pallas TPU kernel."""
    orig_shape = x.shape
    orig_dtype = x.dtype
    itemsize = jnp.dtype(orig_dtype).itemsize

    flat = x.reshape(-1)
    n = flat.shape[0]
    if n == 0:
        return x

    sub = _sublane_factor(orig_dtype)

    # Lane-dense 2-D slab [rows, 128].  When n % 128 == 0 (common case) the
    # reshape is free and there is no extra HBM pass; ragged rows (% sub != 0)
    # are handled by partial blocks below.
    padded = (n % _LANE) != 0
    if padded:
        # TODO(synk): for large unaligned n, avoid this extra HBM pass by
        # processing the aligned prefix in-kernel and handling the <128-elem
        # tail separately (or via a manual ragged DMA).
        n_pad = pl.cdiv(n, _LANE) * _LANE
        flat = jnp.pad(flat, (0, n_pad - n))
    rows = flat.shape[0] // _LANE
    slab = flat.reshape(rows, _LANE)

    # Block size: ~4 MiB per array to amortize per-step overhead, capped so
    # the grid still spans >= _MIN_GRID_STEPS steps when the tensor allows.
    rows_by_bytes = max(sub, _TARGET_BLOCK_BYTES // (_LANE * itemsize))
    rows_by_split = pl.cdiv(rows, _MIN_GRID_STEPS)
    tile_rows = min(rows_by_bytes, rows_by_split)
    tile_rows = pl.cdiv(tile_rows, sub) * sub     # sublane-aligned block shape
    if tile_rows >= rows:
        tile_rows = rows                          # full-extent block: always legal
    grid = (pl.cdiv(rows, tile_rows),)

    n_proc = rows * _LANE
    cost = pl.CostEstimate(
        flops=7 * n_proc,
        transcendentals=2 * n_proc,               # exp + reciprocal per element
        bytes_accessed=2 * n_proc * itemsize,
    )

    out = pl.pallas_call(
        _helu_kernel,
        out_shape=jax.ShapeDtypeStruct((rows, _LANE), orig_dtype),
        grid_spec=pltpu.PrefetchScalarGridSpec(
            num_scalar_prefetch=0,
            grid=grid,
            in_specs=[pl.BlockSpec((tile_rows, _LANE), lambda i: (i, 0))],
            out_specs=pl.BlockSpec((tile_rows, _LANE), lambda i: (i, 0)),
        ),
        compiler_params=pltpu.CompilerParams(
            dimension_semantics=("parallel",),
            # 2 arrays x 2 buffers x ~4 MiB ~= 16 MiB: safe on v5e/v6e (128 MiB
            # physical VMEM) and v7x (64 MiB physical, ~32 MiB scoped default).
            vmem_limit_bytes=32 * 1024 * 1024,
        ),
        cost_estimate=cost,
    )(slab)

    flat_out = out.reshape(-1)
    if padded:
        flat_out = flat_out[:n]
    return flat_out.reshape(orig_shape)


def _helu_ref(x):
    x = x.astype(jnp.float32)
    silu = x * jax.nn.sigmoid(x)
    left = jnp.where(x <= 0.0, silu, 0.0)
    right = jnp.where(x > 0.0, 0.5 * x + jnp.abs(jnp.exp(-x) - 1.0), 0.0)
    return left + right


if __name__ == "__main__":
    key = jax.random.PRNGKey(0)

    # NCHW, same convention as the PyTorch module's typical conv-activation use.
    x = jax.random.normal(key, (2, 4, 16, 16), dtype=jnp.float32)
    y = jax.block_until_ready(helu(x))
    y_ref = _helu_ref(x)
    assert y.shape == x.shape and y.dtype == x.dtype
    # Approx EUP reciprocal trades a few ULPs vs exact sigmoid.
    assert jnp.allclose(y, y_ref, atol=2e-3, rtol=2e-3)

    # Second shape: n is a multiple of 128 but rows % 8 != 0, exercising the
    # no-pad path with a partial last row-block.
    x2 = jax.random.normal(jax.random.PRNGKey(1), (3, 5, 16, 16), dtype=jnp.float32)
    y2 = jax.block_until_ready(helu(x2))
    assert y2.shape == x2.shape and y2.dtype == x2.dtype
    assert jnp.allclose(y2, _helu_ref(x2), atol=2e-3, rtol=2e-3)

    print("KERNEL_OK")
</pallas_src>

<mosaic_0001>
module attributes {stable_mosaic.version = 11 : i64} {
  func.func @_helu_kernel(%arg0: i32, %arg1: memref<8x128xf32, #tpu.memory_space<vmem>>, %arg2: memref<8x128xf32, #tpu.memory_space<vmem>>) attributes {dimension_semantics = [#tpu.dimension_semantics<parallel>], iteration_bounds = array<i64: 2>, scalar_prefetch = 0 : i64, scratch_operands = 0 : i64, tpu.core_type = #tpu.core_type<tc>, window_params = [{transform_indices = @transform_0, window_bounds = array<i64: 8, 128>}, {transform_indices = @transform_1, window_bounds = array<i64: 8, 128>}]} {
    %c0 = arith.constant 0 : index
    %c0_0 = arith.constant 0 : index
    %0 = vector.load %arg1[%c0, %c0_0] : memref<8x128xf32, #tpu.memory_space<vmem>>, vector<8x128xf32>
    %cst = arith.constant 0.000000e+00 : f32
    %1 = vector.broadcast %cst : f32 to vector<8x128xf32>
    %2 = arith.subf %1, %0 : vector<8x128xf32>
    %3 = math.exp %2 : vector<8x128xf32>
    %cst_1 = arith.constant 1.000000e+00 : f32
    %4 = vector.broadcast %cst_1 : f32 to vector<8x128xf32>
    %5 = arith.addf %4, %3 : vector<8x128xf32>
    %6 = tpu.reciprocal %5 {approx = true} : vector<8x128xf32> -> vector<8x128xf32>
    %7 = arith.mulf %0, %6 : vector<8x128xf32>
    %cst_2 = arith.constant 0.000000e+00 : f32
    %8 = vector.broadcast %cst_2 : f32 to vector<8x128xf32>
    %9 = arith.cmpf ole, %0, %8 : vector<8x128xf32>
    %cst_3 = arith.constant 5.000000e-01 : f32
    %10 = vector.broadcast %cst_3 : f32 to vector<8x128xf32>
    %11 = arith.mulf %10, %0 : vector<8x128xf32>
    %cst_4 = arith.constant 1.000000e+00 : f32
    %12 = vector.broadcast %cst_4 : f32 to vector<8x128xf32>
    %13 = arith.subf %12, %3 : vector<8x128xf32>
    %14 = arith.addf %11, %13 : vector<8x128xf32>
    %15 = arith.select %9, %7, %14 : vector<8x128xi1>, vector<8x128xf32>
    %c0_5 = arith.constant 0 : index
    %c0_6 = arith.constant 0 : index
    %16 = vector.load %arg2[%c0_5, %c0_6] : memref<8x128xf32, #tpu.memory_space<vmem>>, vector<8x128xf32>
    tpu.vector_store %arg2[%c0_5, %c0_6], %15 {strides = array<i32>} : memref<8x128xf32, #tpu.memory_space<vmem>>, vector<8x128xf32>,
    return
  }
  func.func @transform_0(%arg0: i32) -> (i32, i32) {
    %c0_i32 = arith.constant 0 : i32
    %c0_i32_0 = arith.constant 0 : i32
    return %arg0, %c0_i32 : i32, i32
  }
  func.func @transform_1(%arg0: i32) -> (i32, i32) {
    %c0_i32 = arith.constant 0 : i32
    %c0_i32_0 = arith.constant 0 : i32
    return %arg0, %c0_i32 : i32, i32
  }
}

</mosaic_0001>

<llo_original>
// kernel: tpu_custom_call.1
$region0: #{tpu_custom_call.1}
  #allocation0 [shape = 'u32[]', space=smem, size = 0x4, offset = 0x4, fixed_abs, tag = 'smem constant byte address 0x4 - core index']
  #allocation1 [shape = 'u32[72,128]{1,0:T(1,128)}', space=vmem, size = 0x9000, scoped, tag = 'internal scratch']
  %s0 = inlined_call_operand.hbm [shape: f32[16,128], index: 0, kind: input, shape index: {}]
  %s1 = inlined_call_operand.hbm [shape: f32[16,128], index: 1, kind: output, shape index: {}]
  %s2 = sld [smem:[#allocation0]]
  $region41: #{tpu_custom_call.1} parent=0
    _
  %s4 = ssub.s32 1, %s2
  %s5 = scalar_select 0, %s4, %s2
  $region1: #{tpu_custom_call.1} parent=0
    #allocation2 [shape = 'u8[8192]{0}', space=vmem, size = 0x2000, scoped, tag = 'input window, operand 0']
    #allocation3 [shape = 's32[2]{0}', space=sflag, size = 0x8, scoped, tag = 'scoped memory for tpu_custom_call.1']
    #allocation4 [shape = 's32[2]{0}', space=sflag, size = 0x8, scoped, tag = 'scoped memory for tpu_custom_call.1']
    #allocation5 [shape = 'u8[8192]{0}', space=vmem, size = 0x2000, scoped, tag = 'output window, operand 0']
    %6 = vsyncpa [#allocation3], 0
    %s7 = scalar_lea.sflag [#allocation3], 1
    %8 = vsyncpa %s7, 0
    %9 = vsyncpa [#allocation4], 0
    %s10 = scalar_lea.sflag [#allocation4], 1
    %11 = vsyncpa %s10, 0
    loop: start=0, step=1, limit=4
    $region2: #{tpu_custom_call.1} parent=1 // loop_pre_header
      _
    $region3: #{tpu_custom_call.1} parent=1 // loop_header
      %s13 = sphi 0, %s17
      %p14 = scmp.ge.s32.totalorder %s13, 4
      %s23 = sphi 0, %s25
      %s26 = sphi 0, %s23
      %s27 = sphi 0, %s26
      %s43 = sphi 0, %s27
      %s49 = sphi 0, %s51
      %s52 = sphi 0, %s49
      %s53 = sphi 0, %s52
      %s69 = sphi 0, %s53
    $region4: #{tpu_custom_call.1} parent=1 // loop_header_branch
      %16 = sbr.rel (%p14) target = $region8
    $region5: #{tpu_custom_call.1} parent=1 // loop_body
      %s18 = ssub.s32 %s13, 1
      %s19 = ssub.s32 %s13, 2
      %s20 = sadd.s32 %s13, 1
      %s21 = ssub.s32 %s13, %s20
      %p22 = scmp.eq.s32.totalorder %s21, 0
      %s24 = sadd.s32 %s23, 1
      %s25 = scalar_select %p22, %s23, %s24
      %p28 = pneg %p22
      %p29 = scmp.eq.s32.totalorder %s13, 1
      %p30 = por %p28, %p29
      %p31 = scmp.ne.s32.totalorder %s23, %s26
      %p32 = scmp.eq.s32.totalorder %s13, 0
      %p33 = por %p31, %p32
      %p34 = scmp.ne.s32.totalorder %s23, %s26
      %p35 = scmp.eq.s32.totalorder %s18, 1
      %p36 = por %p34, %p35
      %p37 = scmp.ne.s32.totalorder %s26, %s27
      %p38 = scmp.eq.s32.totalorder %s18, 0
      %p39 = por %p37, %p38
      %p40 = scmp.ne.s32.totalorder %s26, %s27
      %p41 = scmp.eq.s32.totalorder %s19, 1
      %p42 = por %p40, %p41
      %p44 = scmp.ne.s32.totalorder %s27, %s43
      %p45 = scmp.eq.s32.totalorder %s19, 0
      %p46 = por %p44, %p45
      %s47 = ssub.s32 %s13, %s20
      %p48 = scmp.eq.s32.totalorder %s47, 0
      %s50 = sadd.s32 %s49, 1
      %s51 = scalar_select %p48, %s49, %s50
      %p54 = pneg %p48
      %p55 = scmp.eq.s32.totalorder %s13, 1
      %p56 = por %p54, %p55
      %p57 = scmp.ne.s32.totalorder %s49, %s52
      %p58 = scmp.eq.s32.totalorder %s13, 0
      %p59 = por %p57, %p58
      %p60 = scmp.ne.s32.totalorder %s49, %s52
      %p61 = scmp.eq.s32.totalorder %s18, 1
      %p62 = por %p60, %p61
      %p63 = scmp.ne.s32.totalorder %s52, %s53
      %p64 = scmp.eq.s32.totalorder %s18, 0
      %p65 = por %p63, %p64
      %p66 = scmp.ne.s32.totalorder %s52, %s53
      %p67 = scmp.eq.s32.totalorder %s19, 1
      %p68 = por %p66, %p67
      %p70 = scmp.ne.s32.totalorder %s53, %s69
      %p71 = scmp.eq.s32.totalorder %s19, 0
      %p72 = por %p70, %p71
      %p73 = scmp.le.s32.totalorder 1, %s13
      %p74 = scmp.lt.s32.totalorder %s13, 3
      %p75 = pnand %p73, %p74
      %p76 = pneg %p75
      // Predicated region
      $region9: #{tpu_custom_call.1} parent=5 // pred_check
        _
      $region10: #{tpu_custom_call.1} parent=5 // pred_check_branch
        %78 = sbr.rel (%p75) target = $region12
      $region11: #{tpu_custom_call.1} parent=5 // pred_region
        %s79 = ssub.s32 %s13, 1
      $region12: #{tpu_custom_call.1} parent=5 // pred_fallthru
        _
      %p80 = scmp.lt.s32.totalorder %s13, 2
      // Predicated region
      $region13: #{tpu_custom_call.1} parent=5 // pred_check
        %p81 = pneg %p80
      $region14: #{tpu_custom_call.1} parent=5 // pred_check_branch
        %83 = sbr.rel (%p81) target = $region16
      $region15: #{tpu_custom_call.1} parent=5 // pred_region
        // Predicated region
        $region17: #{tpu_custom_call.1} parent=15 // pred_check
          %p84 = pneg %p33
        $region18: #{tpu_custom_call.1} parent=15 // pred_check_branch
          %86 = sbr.rel (%p84) target = $region20
        $region19: #{tpu_custom_call.1} parent=15 // pred_region
          %s87 = sand.u32 %s23, 1
          %s88 = scalar_lea.sflag [#allocation3], %s87
          %s89 = sand.u32 %s23, 1
          %s90 = smul.addr %s89, 8
          %s91 = scalar_lea.vmem [#allocation2], %s90
          %93 = vsyncadd %s88, 0
          %s94 = smul.addr %s13, 8
          %s95 = scalar_lea.hbm %s0, %s94
          %s97 = sshll.u32 %s95, 4
          %s98 = int_to_ptr.hbm [resolvable:$true] %s97
          %s99 = sshll.u32 %s91, 4
          %s100 = int_to_ptr.vmem [resolvable:$true] %s99
          %102 = dma.hbm_to_vmem [thread:$0]  %s98, 128, %s100, %s88
        $region20: #{tpu_custom_call.1} parent=15 // pred_fallthru
          _
      $region16: #{tpu_custom_call.1} parent=5 // pred_fallthru
        _
      %p103 = scmp.le.s32.totalorder 1, %s13
      %p104 = scmp.lt.s32.totalorder %s13, 3
      %p105 = pnand %p103, %p104
      %p106 = pneg %p105
      // Predicated region
      $region21: #{tpu_custom_call.1} parent=5 // pred_check
        _
      $region22: #{tpu_custom_call.1} parent=5 // pred_check_branch
        %108 = sbr.rel (%p105) target = $region24
      $region23: #{tpu_custom_call.1} parent=5 // pred_region
        %s109 = ssub.s32 %s13, 1
        %s110 = sand.u32 %s26, 1
        %s111 = scalar_lea.sflag [#allocation3], %s110
        %s112 = sand.u32 %s26, 1
        %s113 = smul.addr %s112, 8
        %s114 = scalar_lea.vmem [#allocation2], %s113
        // Predicated region
        $region25: #{tpu_custom_call.1} parent=23 // pred_check
          %p115 = pneg %p39
        $region26: #{tpu_custom_call.1} parent=23 // pred_check_branch
          %117 = sbr.rel (%p115) target = $region28
        $region27: #{tpu_custom_call.1} parent=23 // pred_region
          %119 = dma.done %s111, 128
        $region28: #{tpu_custom_call.1} parent=23 // pred_fallthru
          _
        %s120 = sand.u32 %s26, 1
        %s121 = scalar_lea.sflag [#allocation3], %s120
        %s122 = sand.u32 %s26, 1
        %s123 = smul.addr %s122, 8
        %s124 = scalar_lea.vmem [#allocation2], %s123
        %p125 = pneg %p39
        %p126 = pneg %p36
        %p127 = pneg %p65
        %p128 = pneg %p62
        %s129 = sand.u32 %s52, 1
        %s130 = scalar_lea.sflag [#allocation4], %s129
        %s131 = sand.u32 %s52, 1
        %s132 = smul.addr %s131, 8
        %s133 = scalar_lea.vmem [#allocation5], %s132
        %v134 = vld [vmem:[%s114] sm:$0xff]
        %v135 = vsub.f32 0.0, %v134
        %v136 = vmul.f32 %v135, 1.442695
        %v137 = vpow.pop %v136
        %v138 = vadd.f32 %v137, 1.0
        %v139 = vrcp.pop %v138
        %v140 = vmul.f32 %v134, %v139
        %vm141 = vcmp.le.f32.partialorder %v134, 0.0
        %v142 = vmul.f32 %v134, 0.5
        %v143 = vsub.f32 1.0, %v137
        %v144 = vadd.f32 %v142, %v143
        %v145 = vsel %vm141, %v140, %v144
        %146 = vst [vmem:[%s133] sm:$0xff] %v145
        %s147 = sand.u32 %s52, 1
        %s148 = scalar_lea.sflag [#allocation4], %s147
        %s149 = sand.u32 %s52, 1
        %s150 = smul.addr %s149, 8
        %s151 = scalar_lea.vmem [#allocation5], %s150
        // Predicated region
        $region29: #{tpu_custom_call.1} parent=23 // pred_check
          %p152 = pneg %p62
        $region30: #{tpu_custom_call.1} parent=23 // pred_check_branch
          %154 = sbr.rel (%p152) target = $region32
        $region31: #{tpu_custom_call.1} parent=23 // pred_region
          %156 = vsyncadd %s148, 0
          %s157 = smul.addr %s18, 8
          %s158 = scalar_lea.hbm %s1, %s157
          %s160 = sshll.u32 %s151, 4
          %s161 = int_to_ptr.vmem [resolvable:$true] %s160
          %s162 = sshll.u32 %s158, 4
          %s163 = int_to_ptr.hbm [resolvable:$true] %s162
          %165 = dma.vmem_to_hbm [thread:$0]  %s161, 128, %s163, %s148
        $region32: #{tpu_custom_call.1} parent=23 // pred_fallthru
          _
      $region24: #{tpu_custom_call.1} parent=5 // pred_fallthru
        _
      %p166 = scmp.le.s32.totalorder 2, %s13
      // Predicated region
      $region33: #{tpu_custom_call.1} parent=5 // pred_check
        %p167 = pneg %p166
      $region34: #{tpu_custom_call.1} parent=5 // pred_check_branch
        %169 = sbr.rel (%p167) target = $region36
      $region35: #{tpu_custom_call.1} parent=5 // pred_region
        %s170 = ssub.s32 %s13, 2
        // Predicated region
        $region37: #{tpu_custom_call.1} parent=35 // pred_check
          %p171 = pneg %p68
        $region38: #{tpu_custom_call.1} parent=35 // pred_check_branch
          %173 = sbr.rel (%p171) target = $region40
        $region39: #{tpu_custom_call.1} parent=35 // pred_region
          %s174 = sand.u32 %s53, 1
          %s175 = scalar_lea.sflag [#allocation4], %s174
          %s176 = sand.u32 %s53, 1
          %s177 = smul.addr %s176, 8
          %s178 = scalar_lea.vmem [#allocation5], %s177
          %180 = dma.done %s175, 128
        $region40: #{tpu_custom_call.1} parent=35 // pred_fallthru
          _
      $region36: #{tpu_custom_call.1} parent=5 // pred_fallthru
        _
    $region6: #{tpu_custom_call.1} parent=1 // loop_footer
      %s17 = sadd.s32 1, %s13
    $region7: #{tpu_custom_call.1} parent=1 // loop_footer_branch
      %12 = sbr.rel target = $region3
    $region8: #{tpu_custom_call.1} parent=1 // loop_exit
      _
    %181 = vsyncpa [#allocation3], 1
    %s182 = scalar_lea.sflag [#allocation3], 1
    %183 = vsyncpa %s182, 1
    %184 = vsyncpa [#allocation4], 1
    %s185 = scalar_lea.sflag [#allocation4], 1
    %186 = vsyncpa %s185, 1

</llo_original>
